<compile_context>
chip_gen: v6e
topology: v6e:2x2x1
jax: 0.10.0
libtpu: 0.0.40
codegen_flags: <defaults>
</compile_context>

<pallas_src>
import functools

import jax
import jax.numpy as jnp
from jax.experimental import pallas as pl
from jax.experimental.pallas import tpu as pltpu

C_IN = 128   # fixed by the module definition
KPAD = 32    # 25 folded taps padded up to a multiple of 8 sublanes


def _round_up(v, m):
    return (v + m - 1) // m * m


def _msam_kernel(x_ref, wc_ref, b_ref, out_ref, *, Wp, Lp):
    # x_ref  : [Bt, C, S_in]  spatially pre-padded images, channel-major, flat
    # wc_ref : [KPAD, C]      folded 5x5 weights, row k = ky*5 + kx (rows 25.. zero)
    # b_ref  : SMEM [1]       folded bias
    # out_ref: [Bt, 1, Lp]    sigmoid output on the flat (H, Wp) grid, lane-dense
    bias = b_ref[0]
    bt = x_ref.shape[0]
    for b in range(bt):                       # static unroll; Bt is small
        # One MXU matmul: project every padded pixel onto the 25 folded taps.
        pt = jnp.dot(wc_ref[...], x_ref[b],
                     preferred_element_type=jnp.float32)      # [KPAD, S_in]
        # Output pixel (y, x) lives at flat j = y*Wp + x; tap (ky, kx) reads
        # pt[k, j + ky*Wp + kx].  Tree-reduce via 5 partial accumulators.
        partials = []
        for ky in range(5):
            base = ky * Wp
            acc = pt[ky * 5:ky * 5 + 1, base:base + Lp]
            for kx in range(1, 5):
                k = ky * 5 + kx
                off = base + kx
                acc = acc + pt[k:k + 1, off:off + Lp]
            partials.append(acc)
        s = (partials[0] + partials[1]) + (partials[2] + partials[3]) + partials[4]
        out_ref[b] = jax.nn.sigmoid(s + bias).astype(out_ref.dtype)


def fold_params(conv1_w, conv1_b, conv2_w, conv2_b, conv3_w, conv3_b,
                convf_w, convf_b):
    """Fold the three convs + final 1x1 conv into one [KPAD, C] weight + scalar bias."""
    C = conv1_w.shape[1]
    wf = convf_w.reshape(3).astype(jnp.float32)               # weights for [out1, out2, out3]
    k5 = wf[2] * jnp.transpose(conv3_w[0], (1, 2, 0)).astype(jnp.float32)   # [5,5,C]
    k5 = k5.at[1:4, 1:4, :].add(wf[1] * jnp.transpose(conv2_w[0], (1, 2, 0)))
    k5 = k5.at[2, 2, :].add(wf[0] * conv1_w[0, :, 0, 0])
    wc = jnp.pad(k5.reshape(25, C), ((0, KPAD - 25), (0, 0)))               # [KPAD, C]
    b = wf[0] * conv1_b[0] + wf[1] * conv2_b[0] + wf[2] * conv3_b[0] + convf_b[0]
    return wc.astype(jnp.float32), jnp.reshape(b, (1,)).astype(jnp.float32)


def _pick_block_batch(N, bytes_per_image, budget_bytes=4 << 20, min_steps=2):
    """Largest Bt dividing N that fits the VMEM budget and keeps >= min_steps grid steps."""
    best = 1
    for bt in range(1, N + 1):
        if N % bt:
            continue
        if bt > 1 and bt * bytes_per_image > budget_bytes:
            continue
        if N >= min_steps and N // bt < min_steps:
            continue  # keep >= 2 parallel steps so both v7x TensorCores get work
        best = bt
    return best


@functools.partial(jax.jit, static_argnames=("use_bf16",))
def msam_forward(x_nchw, wc, b_fold, *, use_bf16=False):
    """x_nchw: [N, 128, H, W] -> [N, 1, H, W] float32."""
    N, C, H, W = x_nchw.shape
    Hp, Wp = H + 4, W + 4
    L = H * Wp                               # flat output extent (row stride Wp)
    Lp = _round_up(L, 128)                   # lane-dense output width
    S_in = _round_up(4 * Wp + 4 + Lp, 128)   # covers the max tap read offset

    in_dtype = jnp.bfloat16 if use_bf16 else jnp.float32

    # Spatial zero-pad (pad=2), flatten, and zero tail: done once on the XLA side.
    xp = jnp.pad(x_nchw.astype(in_dtype), ((0, 0), (0, 0), (2, 2), (2, 2)))
    x_flat = jnp.pad(xp.reshape(N, C, Hp * Wp),
                     ((0, 0), (0, 0), (0, S_in - Hp * Wp)))

    bytes_per_image = C * S_in * jnp.dtype(in_dtype).itemsize
    Bt = _pick_block_batch(N, bytes_per_image)
    # TODO(synk): if a single image exceeds the VMEM budget, add an H-tile grid axis.

    out = pl.pallas_call(
        functools.partial(_msam_kernel, Wp=Wp, Lp=Lp),
        out_shape=jax.ShapeDtypeStruct((N, 1, Lp), jnp.float32),
        grid=(N // Bt,),
        in_specs=[
            pl.BlockSpec((Bt, C, S_in), lambda n: (n, 0, 0)),
            pl.BlockSpec((KPAD, C), lambda n: (0, 0)),
            pl.BlockSpec(memory_space=pltpu.MemorySpace.SMEM),
        ],
        out_specs=pl.BlockSpec((Bt, 1, Lp), lambda n: (n, 0, 0)),
        compiler_params=pltpu.CompilerParams(
            dimension_semantics=("parallel",)),
    )(x_flat, wc.astype(in_dtype), b_fold)

    # Crop the +4 pad columns per row and the lane-dense tail; restore NCHW.
    return out[:, :, :L].reshape(N, 1, H, Wp)[:, :, :, :W]


def _reference(x, conv1_w, conv1_b, conv2_w, conv2_b, conv3_w, conv3_b,
               convf_w, convf_b):
    """Pure-JAX reference matching the PyTorch forward (NCHW, OIHW)."""
    def conv(xx, w, bias, pad):
        y = jax.lax.conv_general_dilated(
            xx, w, window_strides=(1, 1),
            padding=((pad, pad), (pad, pad)),
            dimension_numbers=('NCHW', 'OIHW', 'NCHW'))
        return y + bias.reshape(1, -1, 1, 1)

    o1 = conv(x, conv1_w, conv1_b, 0)
    o2 = conv(x, conv2_w, conv2_b, 1)
    o3 = conv(x, conv3_w, conv3_b, 2)
    cat = jnp.concatenate([o1, o2, o3], axis=1)
    return jax.nn.sigmoid(conv(cat, convf_w, convf_b, 0))


if __name__ == "__main__":
    key = jax.random.PRNGKey(0)
    k1, k2, k3, k4, kx = jax.random.split(key, 5)

    # Deterministic synthetic parameters (shapes from the module __init__).
    conv1_w = jax.random.normal(k1, (1, C_IN, 1, 1), jnp.float32) * 0.05
    conv1_b = jnp.array([0.01], jnp.float32)
    conv2_w = jax.random.normal(k2, (1, C_IN, 3, 3), jnp.float32) * 0.05
    conv2_b = jnp.array([0.02], jnp.float32)
    conv3_w = jax.random.normal(k3, (1, C_IN, 5, 5), jnp.float32) * 0.05
    conv3_b = jnp.array([-0.01], jnp.float32)
    convf_w = jax.random.normal(k4, (1, 3, 1, 1), jnp.float32) * 0.5
    convf_b = jnp.array([0.03], jnp.float32)

    wc, b_fold = fold_params(conv1_w, conv1_b, conv2_w, conv2_b,
                             conv3_w, conv3_b, convf_w, convf_b)

    # Small example input: batch=2, 128 channels (required by conv1), 16x16.
    x = jax.random.normal(kx, (2, C_IN, 16, 16), jnp.float32)

    out = jax.block_until_ready(msam_forward(x, wc, b_fold))

    ref = jax.block_until_ready(
        _reference(x, conv1_w, conv1_b, conv2_w, conv2_b,
                   conv3_w, conv3_b, convf_w, convf_b))

    assert out.shape == (2, 1, 16, 16), out.shape
    err = float(jnp.max(jnp.abs(out - ref)))
    assert jnp.allclose(out, ref, atol=1e-4, rtol=1e-4), err

    print("KERNEL_OK")
</pallas_src>

<mosaic_0001>
module attributes {stable_mosaic.version = 11 : i64} {
  func.func @_msam_kernel(%arg0: i32, %arg1: memref<1x128x512xf32, #tpu.memory_space<vmem>>, %arg2: memref<32x128xf32, #tpu.memory_space<vmem>>, %arg3: memref<1xf32, #tpu.memory_space<smem>>, %arg4: memref<1x1x384xf32, #tpu.memory_space<vmem>>) attributes {dimension_semantics = [#tpu.dimension_semantics<parallel>], iteration_bounds = array<i64: 2>, scalar_prefetch = 0 : i64, scratch_operands = 0 : i64, tpu.core_type = #tpu.core_type<tc>, window_params = [{transform_indices = @transform_0, window_bounds = array<i64: 1, 128, 512>}, {pipeline_mode = #tpu.pipeline_mode<synchronous>, transform_indices = @transform_1, window_bounds = array<i64: 32, 128>}, {transform_indices = @transform_2, window_bounds = array<i64: 1>}, {transform_indices = @transform_3, window_bounds = array<i64: 1, 1, 384>}]} {
    %c0 = arith.constant 0 : index
    %0 = memref.load %arg3[%c0] : memref<1xf32, #tpu.memory_space<smem>>
    %c0_0 = arith.constant 0 : index
    %c0_1 = arith.constant 0 : index
    %1 = vector.load %arg2[%c0_0, %c0_1] : memref<32x128xf32, #tpu.memory_space<vmem>>, vector<32x128xf32>
    %c0_2 = arith.constant 0 : index
    %c0_3 = arith.constant 0 : index
    %c0_4 = arith.constant 0 : index
    %2 = vector.load %arg1[%c0_2, %c0_3, %c0_4] : memref<1x128x512xf32, #tpu.memory_space<vmem>>, vector<1x128x512xf32>
    %3 = vector.shape_cast %2 : vector<1x128x512xf32> to vector<128x512xf32>
    %cst = arith.constant dense<0.000000e+00> : vector<32x512xf32>
    %4 = tpu.matmul %1, %3, %cst {dimension_numbers = #tpu.dot_dimension_numbers<[1], [0], [0], [1], [0, 0, 1, 1], [], []>} : vector<32x128xf32>, vector<128x512xf32>, vector<32x512xf32> -> vector<32x512xf32>
    %5 = vector.extract_strided_slice %4 {offsets = [0, 0], sizes = [1, 384], strides = [1, 1]} : vector<32x512xf32> to vector<1x384xf32>
    %6 = vector.extract_strided_slice %4 {offsets = [1, 1], sizes = [1, 384], strides = [1, 1]} : vector<32x512xf32> to vector<1x384xf32>
    %7 = arith.addf %5, %6 : vector<1x384xf32>
    %8 = vector.extract_strided_slice %4 {offsets = [2, 2], sizes = [1, 384], strides = [1, 1]} : vector<32x512xf32> to vector<1x384xf32>
    %9 = arith.addf %7, %8 : vector<1x384xf32>
    %10 = vector.extract_strided_slice %4 {offsets = [3, 3], sizes = [1, 384], strides = [1, 1]} : vector<32x512xf32> to vector<1x384xf32>
    %11 = arith.addf %9, %10 : vector<1x384xf32>
    %12 = vector.extract_strided_slice %4 {offsets = [4, 4], sizes = [1, 384], strides = [1, 1]} : vector<32x512xf32> to vector<1x384xf32>
    %13 = arith.addf %11, %12 : vector<1x384xf32>
    %14 = vector.extract_strided_slice %4 {offsets = [5, 20], sizes = [1, 384], strides = [1, 1]} : vector<32x512xf32> to vector<1x384xf32>
    %15 = vector.extract_strided_slice %4 {offsets = [6, 21], sizes = [1, 384], strides = [1, 1]} : vector<32x512xf32> to vector<1x384xf32>
    %16 = arith.addf %14, %15 : vector<1x384xf32>
    %17 = vector.extract_strided_slice %4 {offsets = [7, 22], sizes = [1, 384], strides = [1, 1]} : vector<32x512xf32> to vector<1x384xf32>
    %18 = arith.addf %16, %17 : vector<1x384xf32>
    %19 = vector.extract_strided_slice %4 {offsets = [8, 23], sizes = [1, 384], strides = [1, 1]} : vector<32x512xf32> to vector<1x384xf32>
    %20 = arith.addf %18, %19 : vector<1x384xf32>
    %21 = vector.extract_strided_slice %4 {offsets = [9, 24], sizes = [1, 384], strides = [1, 1]} : vector<32x512xf32> to vector<1x384xf32>
    %22 = arith.addf %20, %21 : vector<1x384xf32>
    %23 = vector.extract_strided_slice %4 {offsets = [10, 40], sizes = [1, 384], strides = [1, 1]} : vector<32x512xf32> to vector<1x384xf32>
    %24 = vector.extract_strided_slice %4 {offsets = [11, 41], sizes = [1, 384], strides = [1, 1]} : vector<32x512xf32> to vector<1x384xf32>
    %25 = arith.addf %23, %24 : vector<1x384xf32>
    %26 = vector.extract_strided_slice %4 {offsets = [12, 42], sizes = [1, 384], strides = [1, 1]} : vector<32x512xf32> to vector<1x384xf32>
    %27 = arith.addf %25, %26 : vector<1x384xf32>
    %28 = vector.extract_strided_slice %4 {offsets = [13, 43], sizes = [1, 384], strides = [1, 1]} : vector<32x512xf32> to vector<1x384xf32>
    %29 = arith.addf %27, %28 : vector<1x384xf32>
    %30 = vector.extract_strided_slice %4 {offsets = [14, 44], sizes = [1, 384], strides = [1, 1]} : vector<32x512xf32> to vector<1x384xf32>
    %31 = arith.addf %29, %30 : vector<1x384xf32>
    %32 = vector.extract_strided_slice %4 {offsets = [15, 60], sizes = [1, 384], strides = [1, 1]} : vector<32x512xf32> to vector<1x384xf32>
    %33 = vector.extract_strided_slice %4 {offsets = [16, 61], sizes = [1, 384], strides = [1, 1]} : vector<32x512xf32> to vector<1x384xf32>
    %34 = arith.addf %32, %33 : vector<1x384xf32>
    %35 = vector.extract_strided_slice %4 {offsets = [17, 62], sizes = [1, 384], strides = [1, 1]} : vector<32x512xf32> to vector<1x384xf32>
    %36 = arith.addf %34, %35 : vector<1x384xf32>
    %37 = vector.extract_strided_slice %4 {offsets = [18, 63], sizes = [1, 384], strides = [1, 1]} : vector<32x512xf32> to vector<1x384xf32>
    %38 = arith.addf %36, %37 : vector<1x384xf32>
    %39 = vector.extract_strided_slice %4 {offsets = [19, 64], sizes = [1, 384], strides = [1, 1]} : vector<32x512xf32> to vector<1x384xf32>
    %40 = arith.addf %38, %39 : vector<1x384xf32>
    %41 = vector.extract_strided_slice %4 {offsets = [20, 80], sizes = [1, 384], strides = [1, 1]} : vector<32x512xf32> to vector<1x384xf32>
    %42 = vector.extract_strided_slice %4 {offsets = [21, 81], sizes = [1, 384], strides = [1, 1]} : vector<32x512xf32> to vector<1x384xf32>
    %43 = arith.addf %41, %42 : vector<1x384xf32>
    %44 = vector.extract_strided_slice %4 {offsets = [22, 82], sizes = [1, 384], strides = [1, 1]} : vector<32x512xf32> to vector<1x384xf32>
    %45 = arith.addf %43, %44 : vector<1x384xf32>
    %46 = vector.extract_strided_slice %4 {offsets = [23, 83], sizes = [1, 384], strides = [1, 1]} : vector<32x512xf32> to vector<1x384xf32>
    %47 = arith.addf %45, %46 : vector<1x384xf32>
    %48 = vector.extract_strided_slice %4 {offsets = [24, 84], sizes = [1, 384], strides = [1, 1]} : vector<32x512xf32> to vector<1x384xf32>
    %49 = arith.addf %47, %48 : vector<1x384xf32>
    %50 = arith.addf %13, %22 : vector<1x384xf32>
    %51 = arith.addf %31, %40 : vector<1x384xf32>
    %52 = arith.addf %50, %51 : vector<1x384xf32>
    %53 = arith.addf %52, %49 : vector<1x384xf32>
    %54 = vector.broadcast %0 : f32 to vector<1x384xf32>
    %55 = arith.addf %53, %54 : vector<1x384xf32>
    %56 = arith.negf %55 : vector<1x384xf32>
    %57 = math.exp %56 : vector<1x384xf32>
    %cst_5 = arith.constant 1.000000e+00 : f32
    %58 = vector.broadcast %cst_5 : f32 to vector<1x384xf32>
    %59 = arith.addf %58, %57 : vector<1x384xf32>
    %60 = arith.divf %58, %59 : vector<1x384xf32>
    %c0_6 = arith.constant 0 : index
    %c0_7 = arith.constant 0 : index
    %c0_8 = arith.constant 0 : index
    %61 = vector.load %arg4[%c0_6, %c0_7, %c0_8] : memref<1x1x384xf32, #tpu.memory_space<vmem>>, vector<1x1x384xf32>
    %62 = vector.shape_cast %61 : vector<1x1x384xf32> to vector<1x384xf32>
    %63 = vector.shape_cast %60 : vector<1x384xf32> to vector<1x1x384xf32>
    tpu.vector_store %arg4[%c0_6, %c0_7, %c0_8], %63 {strides = array<i32>} : memref<1x1x384xf32, #tpu.memory_space<vmem>>, vector<1x1x384xf32>,
    return
  }
  func.func @transform_0(%arg0: i32) -> (i32, i32, i32) {
    %c0_i32 = arith.constant 0 : i32
    %c0_i32_0 = arith.constant 0 : i32
    %c0_i32_1 = arith.constant 0 : i32
    return %arg0, %c0_i32, %c0_i32_0 : i32, i32, i32
  }
  func.func @transform_1(%arg0: i32) -> (i32, i32) {
    %c0_i32 = arith.constant 0 : i32
    %c0_i32_0 = arith.constant 0 : i32
    %c0_i32_1 = arith.constant 0 : i32
    return %c0_i32, %c0_i32_0 : i32, i32
  }
  func.func @transform_2(%arg0: i32) -> i32 {
    %c0_i32 = arith.constant 0 : i32
    %c0_i32_0 = arith.constant 0 : i32
    return %c0_i32 : i32
  }
  func.func @transform_3(%arg0: i32) -> (i32, i32, i32) {
    %c0_i32 = arith.constant 0 : i32
    %c0_i32_0 = arith.constant 0 : i32
    %c0_i32_1 = arith.constant 0 : i32
    return %arg0, %c0_i32, %c0_i32_0 : i32, i32, i32
  }
}

</mosaic_0001>

<llo_original>
// kernel: msam_forward.1
$region0: #{msam_forward.1}
  #allocation0 [shape = 'u32[]', space=smem, size = 0x4, offset = 0x4, fixed_abs, tag = 'smem constant byte address 0x4 - core index']
  #allocation1 [shape = 'u32[144,128]{1,0:T(1,128)}', space=vmem, size = 0x12000, scoped, tag = 'internal scratch']
  #allocation2 [shape = 'f32[1]{0:T(128)S(6)}', space=smem, size = 0x200, scoped, tag = 'scoped memory for msam_forward.1']
  %s0 = inlined_call_operand.vmem [shape: f32[2,128,512], index: 0, kind: input, shape index: {}]
  %s1 = inlined_call_operand.vmem [shape: f32[32,128], index: 1, kind: input, shape index: {}]
  %s2 = inlined_call_operand.<no memory space> [shape: f32[1], index: 2, kind: input, shape index: {}]
  %s3 = inlined_call_operand.vmem [shape: f32[2,1,384], index: 3, kind: output, shape index: {}]
  %s4 = sld [smem:[#allocation0]]
  $region45: #{msam_forward.1} parent=0
    _
  %s6 = ssub.s32 1, %s4
  %s7 = scalar_select 0, %s6, %s4
  %8 = sst [smem:[#allocation2]] %s2
  loop: start=0, step=1, limit=4
  $region2: #{msam_forward.1} parent=0 // loop_pre_header
    _
  $region3: #{msam_forward.1} parent=0 // loop_header
    %s10 = sphi 0, %s14
    %p11 = scmp.ge.s32.totalorder %s10, 4
    %s20 = sphi 0, %s22
    %s23 = sphi 0, %s20
    %s24 = sphi 0, %s23
    %s40 = sphi 0, %s24
    %s44 = sphi 0, %s44
    %s46 = sphi 0, %s44
    %s47 = sphi 0, %s46
    %s61 = sphi 0, %s47
    %s65 = sphi 0, %s65
    %s67 = sphi 0, %s65
    %s68 = sphi 0, %s67
    %s82 = sphi 0, %s68
    %s88 = sphi 0, %s90
    %s91 = sphi 0, %s88
    %s92 = sphi 0, %s91
    %s108 = sphi 0, %s92
  $region4: #{msam_forward.1} parent=0 // loop_header_branch
    %13 = sbr.rel (%p11) target = $region8
  $region5: #{msam_forward.1} parent=0 // loop_body
    %s15 = ssub.s32 %s10, 1
    %s16 = ssub.s32 %s10, 2
    %s17 = sadd.s32 %s10, 1
    %s18 = ssub.s32 %s10, %s17
    %p19 = scmp.eq.s32.totalorder %s18, 0
    %s21 = sadd.s32 %s20, 1
    %s22 = scalar_select %p19, %s20, %s21
    %p25 = pneg %p19
    %p26 = scmp.eq.s32.totalorder %s10, 1
    %p27 = por %p25, %p26
    %p28 = scmp.ne.s32.totalorder %s20, %s23
    %p29 = scmp.eq.s32.totalorder %s10, 0
    %p30 = por %p28, %p29
    %p31 = scmp.ne.s32.totalorder %s20, %s23
    %p32 = scmp.eq.s32.totalorder %s15, 1
    %p33 = por %p31, %p32
    %p34 = scmp.ne.s32.totalorder %s23, %s24
    %p35 = scmp.eq.s32.totalorder %s15, 0
    %p36 = por %p34, %p35
    %p37 = scmp.ne.s32.totalorder %s23, %s24
    %p38 = scmp.eq.s32.totalorder %s16, 1
    %p39 = por %p37, %p38
    %p41 = scmp.ne.s32.totalorder %s24, %s40
    %p42 = scmp.eq.s32.totalorder %s16, 0
    %p43 = por %p41, %p42
    %s45 = sadd.s32 %s44, 1
    %p48 = scmp.eq.s32.totalorder %s10, 1
    %p49 = scmp.ne.s32.totalorder %s44, %s46
    %p50 = scmp.eq.s32.totalorder %s10, 0
    %p51 = por %p49, %p50
    %p52 = scmp.ne.s32.totalorder %s44, %s46
    %p53 = scmp.eq.s32.totalorder %s15, 1
    %p54 = por %p52, %p53
    %p55 = scmp.ne.s32.totalorder %s46, %s47
    %p56 = scmp.eq.s32.totalorder %s15, 0
    %p57 = por %p55, %p56
    %p58 = scmp.ne.s32.totalorder %s46, %s47
    %p59 = scmp.eq.s32.totalorder %s16, 1
    %p60 = por %p58, %p59
    %p62 = scmp.ne.s32.totalorder %s47, %s61
    %p63 = scmp.eq.s32.totalorder %s16, 0
    %p64 = por %p62, %p63
    %s66 = sadd.s32 %s65, 1
    %p69 = scmp.eq.s32.totalorder %s10, 1
    %p70 = scmp.ne.s32.totalorder %s65, %s67
    %p71 = scmp.eq.s32.totalorder %s10, 0
    %p72 = por %p70, %p71
    %p73 = scmp.ne.s32.totalorder %s65, %s67
    %p74 = scmp.eq.s32.totalorder %s15, 1
    %p75 = por %p73, %p74
    %p76 = scmp.ne.s32.totalorder %s67, %s68
    %p77 = scmp.eq.s32.totalorder %s15, 0
    %p78 = por %p76, %p77
    %p79 = scmp.ne.s32.totalorder %s67, %s68
    %p80 = scmp.eq.s32.totalorder %s16, 1
    %p81 = por %p79, %p80
    %p83 = scmp.ne.s32.totalorder %s68, %s82
    %p84 = scmp.eq.s32.totalorder %s16, 0
    %p85 = por %p83, %p84
    %s86 = ssub.s32 %s10, %s17
    %p87 = scmp.eq.s32.totalorder %s86, 0
    %s89 = sadd.s32 %s88, 1
    %s90 = scalar_select %p87, %s88, %s89
    %p93 = pneg %p87
    %p94 = scmp.eq.s32.totalorder %s10, 1
    %p95 = por %p93, %p94
    %p96 = scmp.ne.s32.totalorder %s88, %s91
    %p97 = scmp.eq.s32.totalorder %s10, 0
    %p98 = por %p96, %p97
    %p99 = scmp.ne.s32.totalorder %s88, %s91
    %p100 = scmp.eq.s32.totalorder %s15, 1
    %p101 = por %p99, %p100
    %p102 = scmp.ne.s32.totalorder %s91, %s92
    %p103 = scmp.eq.s32.totalorder %s15, 0
    %p104 = por %p102, %p103
    %p105 = scmp.ne.s32.totalorder %s91, %s92
    %p106 = scmp.eq.s32.totalorder %s16, 1
    %p107 = por %p105, %p106
    %p109 = scmp.ne.s32.totalorder %s92, %s108
    %p110 = scmp.eq.s32.totalorder %s16, 0
    %p111 = por %p109, %p110
    %p112 = scmp.le.s32.totalorder 1, %s10
    %p113 = scmp.lt.s32.totalorder %s10, 3
    %p114 = pnand %p112, %p113
    %p115 = pneg %p114
    // Predicated region
    $region9: #{msam_forward.1} parent=5 // pred_check
      _
    $region10: #{msam_forward.1} parent=5 // pred_check_branch
      %117 = sbr.rel (%p114) target = $region12
    $region11: #{msam_forward.1} parent=5 // pred_region
      %s118 = ssub.s32 %s10, 1
      // Predicated region
      $region13: #{msam_forward.1} parent=11 // pred_check
        %p119 = pneg %p57
      $region14: #{msam_forward.1} parent=11 // pred_check_branch
        %121 = sbr.rel (%p119) target = $region16
      $region15: #{msam_forward.1} parent=11 // pred_region
        _
      $region16: #{msam_forward.1} parent=11 // pred_fallthru
        _
      // Predicated region
      $region17: #{msam_forward.1} parent=11 // pred_check
        %p122 = pneg %p78
      $region18: #{msam_forward.1} parent=11 // pred_check_branch
        %124 = sbr.rel (%p122) target = $region20
      $region19: #{msam_forward.1} parent=11 // pred_region
        _
      $region20: #{msam_forward.1} parent=11 // pred_fallthru
        _
    $region12: #{msam_forward.1} parent=5 // pred_fallthru
      _
    %p125 = scmp.lt.s32.totalorder %s10, 2
    // Predicated region
    $region21: #{msam_forward.1} parent=5 // pred_check
      %p126 = pneg %p125
    $region22: #{msam_forward.1} parent=5 // pred_check_branch
      %128 = sbr.rel (%p126) target = $region24
    $region23: #{msam_forward.1} parent=5 // pred_region
      // Predicated region
      $region25: #{msam_forward.1} parent=23 // pred_check
        %p129 = pneg %p30
      $region26: #{msam_forward.1} parent=23 // pred_check_branch
        %131 = sbr.rel (%p129) target = $region28
      $region27: #{msam_forward.1} parent=23 // pred_region
        %p132 = scmp.lt.s32.totalorder %s10, 1
        %s133 = scalar_select %p132, %s10, 1
        %s134 = smul.addr %s133, 64
        %s135 = smul.addr %s134, 8
        %s136 = scalar_lea.vmem %s0, %s135
      $region28: #{msam_forward.1} parent=23 // pred_fallthru
        _
    $region24: #{msam_forward.1} parent=5 // pred_fallthru
      _
    %p137 = scmp.le.s32.totalorder 1, %s10
    %p138 = scmp.lt.s32.totalorder %s10, 3
    %p139 = pnand %p137, %p138
    %p140 = pneg %p139
    // Predicated region
    $region29: #{msam_forward.1} parent=5 // pred_check
      _
    $region30: #{msam_forward.1} parent=5 // pred_check_branch
      %142 = sbr.rel (%p139) target = $region32
    $region31: #{msam_forward.1} parent=5 // pred_region
      %s143 = ssub.s32 %s10, 1
      %p144 = scmp.lt.s32.totalorder %s15, 1
      %s145 = scalar_select %p144, %s15, 1
      %s146 = smul.addr %s145, 64
      %s147 = smul.addr %s146, 8
      %s148 = scalar_lea.vmem %s0, %s147
      %p149 = pneg %p36
      %p150 = pneg %p33
      %p151 = pneg %p57
      %p152 = pneg %p54
      %p153 = pneg %p78
      %p154 = pneg %p75
      %p155 = pneg %p104
      %p156 = pneg %p101
      %p157 = scmp.lt.s32.totalorder %s15, 1
      %s158 = scalar_select %p157, %s15, 1
      %s159 = smul.addr %s158, 3
      %s160 = scalar_lea.vmem %s3, %s159
      %p161 = scmp.lt.s32.totalorder %s15, 1
      %s162 = scalar_select %p161, %s15, 1
      %s163 = smul.addr %s162, 64
      %s164 = smul.addr %s163, 8
      %s165 = scalar_lea.vmem %s0, %s164
      %p166 = scmp.lt.s32.totalorder %s15, 1
      %s167 = scalar_select %p166, %s15, 1
      %s168 = smul.addr %s167, 3
      %s169 = scalar_lea.vmem %s3, %s168
      %s170 = sld [smem:[#allocation2]]
      %v171 = vld [vmem:[%s1] sm:$0xff]
      %v172 = vld [vmem:[%s1 + $0x8] sm:$0xff]
      %v173 = vld [vmem:[%s1 + $0x10] sm:$0xff]
      %v174 = vld [vmem:[%s1 + $0x18] sm:$0xff]
      %v175 = vld [vmem:[%s165] sm:$0xff]
      %v176 = vld [vmem:[%s165 + $0x8] sm:$0xff]
      %v177 = vld [vmem:[%s165 + $0x10] sm:$0xff]
      %v178 = vld [vmem:[%s165 + $0x18] sm:$0xff]
      %v179 = vld [vmem:[%s165 + $0x20] sm:$0xff]
      %v180 = vld [vmem:[%s165 + $0x28] sm:$0xff]
      %v181 = vld [vmem:[%s165 + $0x30] sm:$0xff]
      %v182 = vld [vmem:[%s165 + $0x38] sm:$0xff]
      %v183 = vld [vmem:[%s165 + $0x40] sm:$0xff]
      %v184 = vld [vmem:[%s165 + $0x48] sm:$0xff]
      %v185 = vld [vmem:[%s165 + $0x50] sm:$0xff]
      %v186 = vld [vmem:[%s165 + $0x58] sm:$0xff]
      %v187 = vld [vmem:[%s165 + $0x60] sm:$0xff]
      %v188 = vld [vmem:[%s165 + $0x68] sm:$0xff]
      %v189 = vld [vmem:[%s165 + $0x70] sm:$0xff]
      %v190 = vld [vmem:[%s165 + $0x78] sm:$0xff]
      %v191 = vld [vmem:[%s165 + $0x80] sm:$0xff]
      %v192 = vld [vmem:[%s165 + $0x88] sm:$0xff]
      %v193 = vld [vmem:[%s165 + $0x90] sm:$0xff]
      %v194 = vld [vmem:[%s165 + $0x98] sm:$0xff]
      %v195 = vld [vmem:[%s165 + $0xa0] sm:$0xff]
      %v196 = vld [vmem:[%s165 + $0xa8] sm:$0xff]
      %v197 = vld [vmem:[%s165 + $0xb0] sm:$0xff]
      %v198 = vld [vmem:[%s165 + $0xb8] sm:$0xff]
      %v199 = vld [vmem:[%s165 + $0xc0] sm:$0xff]
      %v200 = vld [vmem:[%s165 + $0xc8] sm:$0xff]
      %v201 = vld [vmem:[%s165 + $0xd0] sm:$0xff]
      %v202 = vld [vmem:[%s165 + $0xd8] sm:$0xff]
      %v203 = vld [vmem:[%s165 + $0xe0] sm:$0xff]
      %v204 = vld [vmem:[%s165 + $0xe8] sm:$0xff]
      %v205 = vld [vmem:[%s165 + $0xf0] sm:$0xff]
      %v206 = vld [vmem:[%s165 + $0xf8] sm:$0xff]
      %v207 = vld [vmem:[%s165 + $0x100] sm:$0xff]
      %v208 = vld [vmem:[%s165 + $0x108] sm:$0xff]
      %v209 = vld [vmem:[%s165 + $0x110] sm:$0xff]
      %v210 = vld [vmem:[%s165 + $0x118] sm:$0xff]
      %v211 = vld [vmem:[%s165 + $0x120] sm:$0xff]
      %v212 = vld [vmem:[%s165 + $0x128] sm:$0xff]
      %v213 = vld [vmem:[%s165 + $0x130] sm:$0xff]
      %v214 = vld [vmem:[%s165 + $0x138] sm:$0xff]
      %v215 = vld [vmem:[%s165 + $0x140] sm:$0xff]
      %v216 = vld [vmem:[%s165 + $0x148] sm:$0xff]
      %v217 = vld [vmem:[%s165 + $0x150] sm:$0xff]
      %v218 = vld [vmem:[%s165 + $0x158] sm:$0xff]
      %v219 = vld [vmem:[%s165 + $0x160] sm:$0xff]
      %v220 = vld [vmem:[%s165 + $0x168] sm:$0xff]
      %v221 = vld [vmem:[%s165 + $0x170] sm:$0xff]
      %v222 = vld [vmem:[%s165 + $0x178] sm:$0xff]
      %v223 = vld [vmem:[%s165 + $0x180] sm:$0xff]
      %v224 = vld [vmem:[%s165 + $0x188] sm:$0xff]
      %v225 = vld [vmem:[%s165 + $0x190] sm:$0xff]
      %v226 = vld [vmem:[%s165 + $0x198] sm:$0xff]
      %v227 = vld [vmem:[%s165 + $0x1a0] sm:$0xff]
      %v228 = vld [vmem:[%s165 + $0x1a8] sm:$0xff]
      %v229 = vld [vmem:[%s165 + $0x1b0] sm:$0xff]
      %v230 = vld [vmem:[%s165 + $0x1b8] sm:$0xff]
      %v231 = vld [vmem:[%s165 + $0x1c0] sm:$0xff]
      %v232 = vld [vmem:[%s165 + $0x1c8] sm:$0xff]
      %v233 = vld [vmem:[%s165 + $0x1d0] sm:$0xff]
      %v234 = vld [vmem:[%s165 + $0x1d8] sm:$0xff]
      %v235 = vld [vmem:[%s165 + $0x1e0] sm:$0xff]
      %v236 = vld [vmem:[%s165 + $0x1e8] sm:$0xff]
      %v237 = vld [vmem:[%s165 + $0x1f0] sm:$0xff]
      %v238 = vld [vmem:[%s165 + $0x1f8] sm:$0xff]
      %239 = vmatprep.subr.mxu0 %v236
      %240 = vmatpush1.msra.mxu0 %v235
      %241 = vmatprep.subr.mxu0 %v232
      %242 = vmatpush1.msra.mxu0 %v231
      %243 = vmatprep.subr.mxu0 %v228
      %244 = vmatpush1.msra.mxu0 %v227
      %245 = vmatprep.subr.mxu0 %v224
      %246 = vmatpush1.msra.mxu0 %v223
      %247 = vmatprep.subr.mxu0 %v220
      %248 = vmatpush1.msra.mxu0 %v219
      %249 = vmatprep.subr.mxu0 %v216
      %250 = vmatpush1.msra.mxu0 %v215
      %251 = vmatprep.subr.mxu0 %v212
      %252 = vmatpush1.msra.mxu0 %v211
      %253 = vmatprep.subr.mxu0 %v208
      %254 = vmatpush1.msra.mxu0 %v207
      %255 = vmatprep.subr.mxu0 %v204
      %256 = vmatpush1.msra.mxu0 %v203
      %257 = vmatprep.subr.mxu0 %v200
      %258 = vmatpush1.msra.mxu0 %v199
      %259 = vmatprep.subr.mxu0 %v196
      %260 = vmatpush1.msra.mxu0 %v195
      %261 = vmatprep.subr.mxu0 %v192
      %262 = vmatpush1.msra.mxu0 %v191
      %263 = vmatprep.subr.mxu0 %v188
      %264 = vmatpush1.msra.mxu0 %v187
      %265 = vmatprep.subr.mxu0 %v184
      %266 = vmatpush1.msra.mxu0 %v183
      %267 = vmatprep.subr.mxu0 %v180
      %268 = vmatpush1.msra.mxu0 %v179
      %269 = vmatprep.subr.mxu0 %v176
      %270 = vmatpush1.msra.mxu0 %v175
      %271 = vmatprep.subr.mxu0 0.0
      %272 = vmatpush2.msra.mxu0 0.0
      %273 = vmatprep.subr.mxu0 0.0
      %274 = vmatpush2.msra.mxu0 0.0
      %275 = vmatprep.subr.mxu0 0.0
      %276 = vmatpush2.msra.mxu0 0.0
      %277 = vmatprep.subr.mxu0 0.0
      %278 = vmatpush2.msra.mxu0 0.0
      %279 = vmatprep.subr.mxu0 0.0
      %280 = vmatpush2.msra.mxu0 0.0
      %281 = vmatprep.subr.mxu0 0.0
      %282 = vmatpush2.msra.mxu0 0.0
      %283 = vmatprep.subr.mxu0 0.0
      %284 = vmatpush2.msra.mxu0 0.0
      %285 = vmatprep.subr.mxu0 0.0
      %286 = vmatpush2.msra.mxu0 0.0
      %287 = vmatprep.subr.mxu0 0.0
      %288 = vmatpush2.msra.mxu0 0.0
      %289 = vmatprep.subr.mxu0 0.0
      %290 = vmatpush2.msra.mxu0 0.0
      %291 = vmatprep.subr.mxu0 0.0
      %292 = vmatpush2.msra.mxu0 0.0
      %293 = vmatprep.subr.mxu0 0.0
      %294 = vmatpush2.msra.mxu0 0.0
      %295 = vmatprep.subr.mxu0 0.0
      %296 = vmatpush2.msra.mxu0 0.0
      %297 = vmatprep.subr.mxu0 0.0
      %298 = vmatpush2.msra.mxu0 0.0
      %299 = vmatprep.subr.mxu0 0.0
      %300 = vmatpush2.msra.mxu0 0.0
      %301 = vmatprep.subr.mxu0 0.0
      %302 = vmatpush2.msra.mxu0 0.0
      %303 = vmatprep.mubr.f32.mxu0 0.0
      %304 = vmatmul.mubr.f32.gmra.mxu0 %v171
      %v305 = vpop.f32.mrf.mxu0
      %v306 = vadd.f32 0.0, %v305
      %v307 = vpop.f32.mrf.mxu0
      %v308 = vadd.f32 0.0, %v307
      %309 = vmatprep.mubr.f32.mxu0 0.0
      %310 = vmatmul.mubr.f32.gmra.mxu0 %v172
      %v311 = vpop.f32.mrf.mxu0
      %v312 = vadd.f32 0.0, %v311
      %v313 = vpop.f32.mrf.mxu0
      %v314 = vadd.f32 0.0, %v313
      %315 = vmatprep.mubr.f32.mxu0 0.0
      %316 = vmatmul.mubr.f32.gmra.mxu0 %v173
      %v317 = vpop.f32.mrf.mxu0
      %v318 = vadd.f32 0.0, %v317
      %v319 = vpop.f32.mrf.mxu0
      %v320 = vadd.f32 0.0, %v319
      %321 = vmatprep.mubr.f32.mxu0 0.0
      %322 = vmatmul.mubr.f32.gmra.mxu0 %v174
      %v323 = vpop.f32.mrf.mxu0
      %v324 = vadd.f32 0.0, %v323
      %v325 = vpop.f32.mrf.mxu0
      %v326 = vadd.f32 0.0, %v325
      %327 = vdwg.mxu0
      %328 = vmatprep.subr.mxu0 %v238
      %329 = vmatpush1.msra.mxu0 %v237
      %330 = vmatprep.subr.mxu0 %v234
      %331 = vmatpush1.msra.mxu0 %v233
      %332 = vmatprep.subr.mxu0 %v230
      %333 = vmatpush1.msra.mxu0 %v229
      %334 = vmatprep.subr.mxu0 %v226
      %335 = vmatpush1.msra.mxu0 %v225
      %336 = vmatprep.subr.mxu0 %v222
      %337 = vmatpush1.msra.mxu0 %v221
      %338 = vmatprep.subr.mxu0 %v218
      %339 = vmatpush1.msra.mxu0 %v217
      %340 = vmatprep.subr.mxu0 %v214
      %341 = vmatpush1.msra.mxu0 %v213
      %342 = vmatprep.subr.mxu0 %v210
      %343 = vmatpush1.msra.mxu0 %v209
      %344 = vmatprep.subr.mxu0 %v206
      %345 = vmatpush1.msra.mxu0 %v205
      %346 = vmatprep.subr.mxu0 %v202
      %347 = vmatpush1.msra.mxu0 %v201
      %348 = vmatprep.subr.mxu0 %v198
      %349 = vmatpush1.msra.mxu0 %v197
      %350 = vmatprep.subr.mxu0 %v194
      %351 = vmatpush1.msra.mxu0 %v193
      %352 = vmatprep.subr.mxu0 %v190
      %353 = vmatpush1.msra.mxu0 %v189
      %354 = vmatprep.subr.mxu0 %v186
      %355 = vmatpush1.msra.mxu0 %v185
      %356 = vmatprep.subr.mxu0 %v182
      %357 = vmatpush1.msra.mxu0 %v181
      %358 = vmatprep.subr.mxu0 %v178
      %359 = vmatpush1.msra.mxu0 %v177
      %360 = vmatprep.subr.mxu0 0.0
      %361 = vmatpush2.msra.mxu0 0.0
      %362 = vmatprep.subr.mxu0 0.0
      %363 = vmatpush2.msra.mxu0 0.0
      %364 = vmatprep.subr.mxu0 0.0
      %365 = vmatpush2.msra.mxu0 0.0
      %366 = vmatprep.subr.mxu0 0.0
      %367 = vmatpush2.msra.mxu0 0.0
      %368 = vmatprep.subr.mxu0 0.0
      %369 = vmatpush2.msra.mxu0 0.0
      %370 = vmatprep.subr.mxu0 0.0
      %371 = vmatpush2.msra.mxu0 0.0
      %372 = vmatprep.subr.mxu0 0.0
      %373 = vmatpush2.msra.mxu0 0.0
      %374 = vmatprep.subr.mxu0 0.0
      %375 = vmatpush2.msra.mxu0 0.0
      %376 = vmatprep.subr.mxu0 0.0
      %377 = vmatpush2.msra.mxu0 0.0
      %378 = vmatprep.subr.mxu0 0.0
      %379 = vmatpush2.msra.mxu0 0.0
      %380 = vmatprep.subr.mxu0 0.0
      %381 = vmatpush2.msra.mxu0 0.0
      %382 = vmatprep.subr.mxu0 0.0
      %383 = vmatpush2.msra.mxu0 0.0
      %384 = vmatprep.subr.mxu0 0.0
      %385 = vmatpush2.msra.mxu0 0.0
      %386 = vmatprep.subr.mxu0 0.0
      %387 = vmatpush2.msra.mxu0 0.0
      %388 = vmatprep.subr.mxu0 0.0
      %389 = vmatpush2.msra.mxu0 0.0
      %390 = vmatprep.subr.mxu0 0.0
      %391 = vmatpush2.msra.mxu0 0.0
      %392 = vmatprep.mubr.f32.mxu0 0.0
      %393 = vmatmul.mubr.f32.gmra.mxu0 %v171
      %v394 = vpop.f32.mrf.mxu0
      %v395 = vadd.f32 0.0, %v394
      %v396 = vpop.f32.mrf.mxu0
      %v397 = vadd.f32 0.0, %v396
      %398 = vmatprep.mubr.f32.mxu0 0.0
      %399 = vmatmul.mubr.f32.gmra.mxu0 %v172
      %v400 = vpop.f32.mrf.mxu0
      %v401 = vadd.f32 0.0, %v400
      %v402 = vpop.f32.mrf.mxu0
      %v403 = vadd.f32 0.0, %v402
      %404 = vmatprep.mubr.f32.mxu0 0.0
      %405 = vmatmul.mubr.f32.gmra.mxu0 %v173
      %v406 = vpop.f32.mrf.mxu0
      %v407 = vadd.f32 0.0, %v406
      %v408 = vpop.f32.mrf.mxu0
      %v409 = vadd.f32 0.0, %v408
      %410 = vmatprep.mubr.f32.mxu0 0.0
      %411 = vmatmul.mubr.f32.gmra.mxu0 %v174
      %v412 = vpop.f32.mrf.mxu0
      %v413 = vadd.f32 0.0, %v412
      %v414 = vpop.f32.mrf.mxu0
      %v415 = vadd.f32 0.0, %v414
      %416 = vdwg.mxu0
      %v421 = vrot.slane %v306, 1
      %v422 = vrot.slane %v308, 1
      %v423 = vrot.slane %v395, 1
      %v424 = vrot.slane %v397, 1
      %425 = vrot.lane.b32.xlu0 %v421, 127
      %v426 = vpop.permute.xlu0 %425
      %427 = vrot.lane.b32.xlu0 %v422, 127
      %v428 = vpop.permute.xlu0 %427
      %429 = vrot.lane.b32.xlu0 %v423, 127
      %v430 = vpop.permute.xlu0 %429
      %431 = vrot.lane.b32.xlu0 %v424, 127
      %v432 = vpop.permute.xlu0 %431
      %vm433 = vcmask 1039360
      %v434 = vsel %vm433, %v426, %v428
      %v435 = vsel %vm433, %v428, %v430
      %v436 = vsel %vm433, %v430, %v432
      %v440 = vadd.f32 %v306, %v434
      %v441 = vadd.f32 %v308, %v435
      %v442 = vadd.f32 %v395, %v436
      %v443 = vrot.slane %v306, 2
      %v444 = vrot.slane %v308, 2
      %v445 = vrot.slane %v395, 2
      %v446 = vrot.slane %v397, 2
      %447 = vrot.lane.b32.xlu0 %v443, 126
      %v448 = vpop.permute.xlu0 %447
      %449 = vrot.lane.b32.xlu0 %v444, 126
      %v450 = vpop.permute.xlu0 %449
      %451 = vrot.lane.b32.xlu0 %v445, 126
      %v452 = vpop.permute.xlu0 %451
      %453 = vrot.lane.b32.xlu0 %v446, 126
      %v454 = vpop.permute.xlu0 %453
      %vm455 = vcmask 1031168
      %v456 = vsel %vm455, %v448, %v450
      %v457 = vsel %vm455, %v450, %v452
      %v458 = vsel %vm455, %v452, %v454
      %v462 = vadd.f32 %v440, %v456
      %v463 = vadd.f32 %v441, %v457
      %v464 = vadd.f32 %v442, %v458
      %v465 = vrot.slane %v306, 3
      %v466 = vrot.slane %v308, 3
      %v467 = vrot.slane %v395, 3
      %v468 = vrot.slane %v397, 3
      %469 = vrot.lane.b32.xlu0 %v465, 125
      %v470 = vpop.permute.xlu0 %469
      %471 = vrot.lane.b32.xlu0 %v466, 125
      %v472 = vpop.permute.xlu0 %471
      %473 = vrot.lane.b32.xlu0 %v467, 125
      %v474 = vpop.permute.xlu0 %473
      %475 = vrot.lane.b32.xlu0 %v468, 125
      %v476 = vpop.permute.xlu0 %475
      %vm477 = vcmask 1022976
      %v478 = vsel %vm477, %v470, %v472
      %v479 = vsel %vm477, %v472, %v474
      %v480 = vsel %vm477, %v474, %v476
      %v484 = vadd.f32 %v462, %v478
      %v485 = vadd.f32 %v463, %v479
      %v486 = vadd.f32 %v464, %v480
      %v487 = vrot.slane %v306, 4
      %v488 = vrot.slane %v308, 4
      %v489 = vrot.slane %v395, 4
      %v490 = vrot.slane %v397, 4
      %491 = vrot.lane.b32.xlu0 %v487, 124
      %v492 = vpop.permute.xlu0 %491
      %493 = vrot.lane.b32.xlu0 %v488, 124
      %v494 = vpop.permute.xlu0 %493
      %495 = vrot.lane.b32.xlu0 %v489, 124
      %v496 = vpop.permute.xlu0 %495
      %497 = vrot.lane.b32.xlu0 %v490, 124
      %v498 = vpop.permute.xlu0 %497
      %vm499 = vcmask 1014784
      %v500 = vsel %vm499, %v492, %v494
      %v501 = vsel %vm499, %v494, %v496
      %v502 = vsel %vm499, %v496, %v498
      %v506 = vadd.f32 %v484, %v500
      %v507 = vadd.f32 %v485, %v501
      %v508 = vadd.f32 %v486, %v502
      %v510 = vadd.f32 %v397, %v432
      %v512 = vadd.f32 %v510, %v454
      %v517 = vrot.slane %v312, 3
      %v518 = vrot.slane %v314, 3
      %v519 = vrot.slane %v401, 3
      %v520 = vrot.slane %v403, 3
      %521 = vrot.lane.b32.xlu0 %v517, 125
      %v522 = vpop.permute.xlu0 %521
      %523 = vrot.lane.b32.xlu0 %v518, 125
      %v524 = vpop.permute.xlu0 %523
      %525 = vrot.lane.b32.xlu0 %v519, 125
      %v526 = vpop.permute.xlu0 %525
      %527 = vrot.lane.b32.xlu0 %v520, 125
      %v528 = vpop.permute.xlu0 %527
      %v529 = vsel %vm477, %v522, %v524
      %v530 = vsel %vm477, %v524, %v526
      %v531 = vsel %vm477, %v526, %v528
      %v536 = vadd.f32 %v462, %v529
      %v537 = vadd.f32 %v463, %v530
      %v538 = vadd.f32 %v464, %v531
      %v539 = vadd.f32 %v512, %v528
      %v540 = vrot.slane %v312, 4
      %v541 = vrot.slane %v314, 4
      %v542 = vrot.slane %v401, 4
      %v543 = vrot.slane %v403, 4
      %544 = vrot.lane.b32.xlu0 %v540, 124
      %v545 = vpop.permute.xlu0 %544
      %546 = vrot.lane.b32.xlu0 %v541, 124
      %v547 = vpop.permute.xlu0 %546
      %548 = vrot.lane.b32.xlu0 %v542, 124
      %v549 = vpop.permute.xlu0 %548
      %550 = vrot.lane.b32.xlu0 %v543, 124
      %v551 = vpop.permute.xlu0 %550
      %v552 = vsel %vm499, %v545, %v547
      %v553 = vsel %vm499, %v547, %v549
      %v554 = vsel %vm499, %v549, %v551
      %v559 = vadd.f32 %v536, %v552
      %v560 = vadd.f32 %v537, %v553
      %v561 = vadd.f32 %v538, %v554
      %v562 = vadd.f32 %v539, %v551
      %v563 = vrot.slane %v312, 1
      %v564 = vrot.slane %v314, 1
      %v565 = vrot.slane %v401, 1
      %v566 = vrot.slane %v403, 1
      %567 = vrot.lane.b32.xlu0 %v563, 127
      %v568 = vpop.permute.xlu0 %567
      %569 = vrot.lane.b32.xlu0 %v564, 127
      %v570 = vpop.permute.xlu0 %569
      %571 = vrot.lane.b32.xlu0 %v565, 127
      %v572 = vpop.permute.xlu0 %571
      %573 = vrot.lane.b32.xlu0 %v566, 127
      %v574 = vpop.permute.xlu0 %573
      %v575 = vsel %vm433, %v568, %v570
      %v576 = vsel %vm433, %v570, %v572
      %v577 = vsel %vm433, %v572, %v574
      %v582 = vadd.f32 %v312, %v575
      %v583 = vadd.f32 %v314, %v576
      %v584 = vadd.f32 %v401, %v577
      %v585 = vadd.f32 %v403, %v574
      %v586 = vrot.slane %v312, 2
      %v587 = vrot.slane %v314, 2
      %v588 = vrot.slane %v401, 2
      %v589 = vrot.slane %v403, 2
      %590 = vrot.lane.b32.xlu0 %v586, 126
      %v591 = vpop.permute.xlu0 %590
      %592 = vrot.lane.b32.xlu0 %v587, 126
      %v593 = vpop.permute.xlu0 %592
      %594 = vrot.lane.b32.xlu0 %v588, 126
      %v595 = vpop.permute.xlu0 %594
      %596 = vrot.lane.b32.xlu0 %v589, 126
      %v597 = vpop.permute.xlu0 %596
      %v598 = vsel %vm455, %v591, %v593
      %v599 = vsel %vm455, %v593, %v595
      %v600 = vsel %vm455, %v595, %v597
      %v605 = vadd.f32 %v582, %v598
      %v606 = vadd.f32 %v583, %v599
      %v607 = vadd.f32 %v584, %v600
      %v608 = vadd.f32 %v585, %v597
      %v609 = vadd.f32 %v605, %v529
      %v610 = vadd.f32 %v606, %v530
      %v611 = vadd.f32 %v607, %v531
      %v612 = vadd.f32 %v608, %v528
      %v613 = vadd.f32 %v609, %v552
      %v614 = vadd.f32 %v610, %v553
      %v615 = vadd.f32 %v611, %v554
      %v616 = vadd.f32 %v612, %v551
      %v621 = vrot.slane %v318, 1
      %v622 = vrot.slane %v320, 1
      %v623 = vrot.slane %v407, 1
      %v624 = vrot.slane %v409, 1
      %625 = vrot.lane.b32.xlu0 %v621, 127
      %v626 = vpop.permute.xlu0 %625
      %627 = vrot.lane.b32.xlu0 %v622, 127
      %v628 = vpop.permute.xlu0 %627
      %629 = vrot.lane.b32.xlu0 %v623, 127
      %v630 = vpop.permute.xlu0 %629
      %631 = vrot.lane.b32.xlu0 %v624, 127
      %v632 = vpop.permute.xlu0 %631
      %v633 = vsel %vm433, %v626, %v628
      %v634 = vsel %vm433, %v628, %v630
      %v635 = vsel %vm433, %v630, %v632
      %v640 = vadd.f32 %v312, %v633
      %v641 = vadd.f32 %v314, %v634
      %v642 = vadd.f32 %v401, %v635
      %v643 = vadd.f32 %v403, %v632
      %v644 = vrot.slane %v318, 2
      %v645 = vrot.slane %v320, 2
      %v646 = vrot.slane %v407, 2
      %v647 = vrot.slane %v409, 2
      %648 = vrot.lane.b32.xlu0 %v644, 126
      %v649 = vpop.permute.xlu0 %648
      %650 = vrot.lane.b32.xlu0 %v645, 126
      %v651 = vpop.permute.xlu0 %650
      %652 = vrot.lane.b32.xlu0 %v646, 126
      %v653 = vpop.permute.xlu0 %652
      %654 = vrot.lane.b32.xlu0 %v647, 126
      %v655 = vpop.permute.xlu0 %654
      %v656 = vsel %vm455, %v649, %v651
      %v657 = vsel %vm455, %v651, %v653
      %v658 = vsel %vm455, %v653, %v655
      %v663 = vadd.f32 %v640, %v656
      %v664 = vadd.f32 %v641, %v657
      %v665 = vadd.f32 %v642, %v658
      %v666 = vadd.f32 %v643, %v655
      %v667 = vrot.slane %v318, 3
      %v668 = vrot.slane %v320, 3
      %v669 = vrot.slane %v407, 3
      %v670 = vrot.slane %v409, 3
      %671 = vrot.lane.b32.xlu0 %v667, 125
      %v672 = vpop.permute.xlu0 %671
      %673 = vrot.lane.b32.xlu0 %v668, 125
      %v674 = vpop.permute.xlu0 %673
      %675 = vrot.lane.b32.xlu0 %v669, 125
      %v676 = vpop.permute.xlu0 %675
      %677 = vrot.lane.b32.xlu0 %v670, 125
      %v678 = vpop.permute.xlu0 %677
      %v679 = vsel %vm477, %v672, %v674
      %v680 = vsel %vm477, %v674, %v676
      %v681 = vsel %vm477, %v676, %v678
      %v686 = vadd.f32 %v663, %v679
      %v687 = vadd.f32 %v664, %v680
      %v688 = vadd.f32 %v665, %v681
      %v689 = vadd.f32 %v666, %v678
      %v690 = vrot.slane %v318, 4
      %v691 = vrot.slane %v320, 4
      %v692 = vrot.slane %v407, 4
      %v693 = vrot.slane %v409, 4
      %694 = vrot.lane.b32.xlu0 %v690, 124
      %v695 = vpop.permute.xlu0 %694
      %696 = vrot.lane.b32.xlu0 %v691, 124
      %v697 = vpop.permute.xlu0 %696
      %698 = vrot.lane.b32.xlu0 %v692, 124
      %v699 = vpop.permute.xlu0 %698
      %700 = vrot.lane.b32.xlu0 %v693, 124
      %v701 = vpop.permute.xlu0 %700
      %v702 = vsel %vm499, %v695, %v697
      %v703 = vsel %vm499, %v697, %v699
      %v704 = vsel %vm499, %v699, %v701
      %v709 = vadd.f32 %v686, %v702
      %v710 = vadd.f32 %v687, %v703
      %v711 = vadd.f32 %v688, %v704
      %v712 = vadd.f32 %v689, %v701
      %v713 = vadd.f32 %v318, %v633
      %v714 = vadd.f32 %v320, %v634
      %v715 = vadd.f32 %v407, %v635
      %v716 = vadd.f32 %v409, %v632
      %v717 = vadd.f32 %v713, %v656
      %v718 = vadd.f32 %v714, %v657
      %v719 = vadd.f32 %v715, %v658
      %v720 = vadd.f32 %v716, %v655
      %v721 = vadd.f32 %v717, %v679
      %v722 = vadd.f32 %v718, %v680
      %v723 = vadd.f32 %v719, %v681
      %v724 = vadd.f32 %v720, %v678
      %v729 = vrot.slane %v324, 4
      %v730 = vrot.slane %v326, 4
      %v731 = vrot.slane %v413, 4
      %v732 = vrot.slane %v415, 4
      %733 = vrot.lane.b32.xlu0 %v729, 124
      %v734 = vpop.permute.xlu0 %733
      %735 = vrot.lane.b32.xlu0 %v730, 124
      %v736 = vpop.permute.xlu0 %735
      %737 = vrot.lane.b32.xlu0 %v731, 124
      %v738 = vpop.permute.xlu0 %737
      %739 = vrot.lane.b32.xlu0 %v732, 124
      %v740 = vpop.permute.xlu0 %739
      %v741 = vsel %vm499, %v734, %v736
      %v742 = vsel %vm499, %v736, %v738
      %v743 = vsel %vm499, %v738, %v740
      %v748 = vadd.f32 %v721, %v741
      %v749 = vadd.f32 %v722, %v742
      %v750 = vadd.f32 %v723, %v743
      %v751 = vadd.f32 %v724, %v740
      %v756 = vrot.slane %v559, 5
      %v757 = vrot.slane %v560, 5
      %v758 = vrot.slane %v561, 5
      %v759 = vrot.slane %v562, 5
      %760 = vrot.lane.b32.xlu0 %v756, 108
      %v761 = vpop.permute.xlu0 %760
      %762 = vrot.lane.b32.xlu0 %v757, 108
      %v763 = vpop.permute.xlu0 %762
      %764 = vrot.lane.b32.xlu0 %v758, 108
      %v765 = vpop.permute.xlu0 %764
      %766 = vrot.lane.b32.xlu0 %v759, 108
      %v767 = vpop.permute.xlu0 %766
      %vm768 = vcmask 883712
      %v769 = vsel %vm768, %v761, %v763
      %v770 = vsel %vm768, %v763, %v765
      %v771 = vsel %vm768, %v765, %v767
      %v775 = vadd.f32 %v506, %v769
      %v776 = vadd.f32 %v507, %v770
      %v777 = vadd.f32 %v508, %v771
      %v782 = vrot.slane %v709, 5
      %v783 = vrot.slane %v710, 5
      %v784 = vrot.slane %v711, 5
      %v785 = vrot.slane %v712, 5
      %786 = vrot.lane.b32.xlu0 %v782, 108
      %v787 = vpop.permute.xlu0 %786
      %788 = vrot.lane.b32.xlu0 %v783, 108
      %v789 = vpop.permute.xlu0 %788
      %790 = vrot.lane.b32.xlu0 %v784, 108
      %v791 = vpop.permute.xlu0 %790
      %792 = vrot.lane.b32.xlu0 %v785, 108
      %v793 = vpop.permute.xlu0 %792
      %v794 = vsel %vm768, %v787, %v789
      %v795 = vsel %vm768, %v789, %v791
      %v796 = vsel %vm768, %v791, %v793
      %v801 = vadd.f32 %v613, %v794
      %v802 = vadd.f32 %v614, %v795
      %v803 = vadd.f32 %v615, %v796
      %v804 = vadd.f32 %v616, %v793
      %v809 = vrot.slane %v801, 2
      %v810 = vrot.slane %v802, 2
      %v811 = vrot.slane %v803, 2
      %v812 = vrot.slane %v804, 2
      %813 = vrot.lane.b32.xlu0 %v809, 88
      %v814 = vpop.permute.xlu0 %813
      %815 = vrot.lane.b32.xlu0 %v810, 88
      %v816 = vpop.permute.xlu0 %815
      %817 = vrot.lane.b32.xlu0 %v811, 88
      %v818 = vpop.permute.xlu0 %817
      %819 = vrot.lane.b32.xlu0 %v812, 88
      %v820 = vpop.permute.xlu0 %819
      %vm821 = vcmask 719872
      %v822 = vsel %vm821, %v814, %v816
      %v823 = vsel %vm821, %v816, %v818
      %v824 = vsel %vm821, %v818, %v820
      %v828 = vadd.f32 %v775, %v822
      %v829 = vadd.f32 %v776, %v823
      %v830 = vadd.f32 %v777, %v824
      %v835 = vrot.slane %v748, 4
      %v836 = vrot.slane %v749, 4
      %v837 = vrot.slane %v750, 4
      %v838 = vrot.slane %v751, 4
      %839 = vrot.lane.b32.xlu0 %v835, 48
      %v840 = vpop.permute.xlu0 %839
      %841 = vrot.lane.b32.xlu0 %v836, 48
      %v842 = vpop.permute.xlu0 %841
      %843 = vrot.lane.b32.xlu0 %v837, 48
      %v844 = vpop.permute.xlu0 %843
      %845 = vrot.lane.b32.xlu0 %v838, 48
      %v846 = vpop.permute.xlu0 %845
      %vm847 = vcmask 392192
      %v848 = vsel %vm847, %v840, %v842
      %v849 = vsel %vm847, %v842, %v844
      %v850 = vsel %vm847, %v844, %v846
      %v854 = vadd.f32 %v828, %v848
      %v855 = vadd.f32 %v829, %v849
      %v856 = vadd.f32 %v830, %v850
      %v857 = vstv %s170
      %v858 = vadd.f32 %v854, %v857
      %v859 = vadd.f32 %v855, %v857
      %v860 = vadd.f32 %v856, %v857
      %v861 = vxor.u32 %v858, 2147483648
      %v862 = vxor.u32 %v859, 2147483648
      %v863 = vxor.u32 %v860, 2147483648
      %v864 = vmul.f32 %v861, 1.442695
      %v865 = vpow.pop %v864
      %v866 = vmul.f32 %v862, 1.442695
      %v867 = vpow.pop %v866
      %v868 = vmul.f32 %v863, 1.442695
      %v869 = vpow.pop %v868
      %v870 = vadd.f32 %v865, 1.0
      %v871 = vadd.f32 %v867, 1.0
      %v872 = vadd.f32 %v869, 1.0
      %v873 = vrcp.pop %v870
      %v874 = vmul.f32 1.0, %v873
      %v875 = vrcp.pop %v871
      %v876 = vmul.f32 1.0, %v875
      %v877 = vrcp.pop %v872
      %v878 = vmul.f32 1.0, %v877
      %v882 = vcombine.low %v874, %v876
      %v884 = vunpack.c.l.s4 1966171168
      %v885 = vunpack.c.0.s8 %v884
      %v886 = vlaneseq
      %v887 = vshrl.u32 %v886, 7
      %v888 = vsub.s32 %v885, %v887
      %v889 = vrot.slane %v882, %v888
      %v891 = vunpack.c.l.s4 1966171168
      %v892 = vunpack.c.0.s8 %v891
      %v893 = vlaneseq
      %v894 = vshrl.u32 %v893, 7
      %v895 = vsub.s32 %v892, %v894
      %v896 = vrot.slane %v878, %v895
      %v897 = vcombine.low %v889, %v896
      %v899 = vunpack.c.l.s4 1966171168
      %v900 = vunpack.c.0.s8 %v899
      %v901 = vlaneseq
      %v902 = vshrl.u32 %v901, 7
      %v903 = vsub.s32 %v900, %v902
      %v904 = vrot.slane %v897, %v903
      %v906 = vlaneseq
      %vm907 = vcmp.ge.s32.totalorder %v906, 0
      %vm908 = vcmp.lt.s32.totalorder %v906, 384
      %vm909 = vmand %vm907, %vm908
      %910 = vst.msk [vmem:[%s169] sm:$0x7] %vm909, %v904
      %p911 = scmp.lt.s32.totalorder %s15, 1
      %s912 = scalar_select %p911, %s15, 1
      %s913 = smul.addr %s912, 3
      %s914 = scalar_lea.vmem %s3, %s913
      // Predicated region
      $region33: #{msam_forward.1} parent=31 // pred_check
        %p915 = pneg %p101
      $region34: #{msam_forward.1} parent=31 // pred_check_branch
        %917 = sbr.rel (%p915) target = $region36
      $region35: #{msam_forward.1} parent=31 // pred_region
        _
      $region36: #{msam_forward.1} parent=31 // pred_fallthru
        _
    $region32: #{msam_forward.1} parent=5 // pred_fallthru
      _
    %p918 = scmp.le.s32.totalorder 2, %s10
    // Predicated region
    $region37: #{msam_forward.1} parent=5 // pred_check
      %p919 = pneg %p918
    $region38: #{msam_forward.1} parent=5 // pred_check_branch
      %921 = sbr.rel (%p919) target = $region40
    $region39: #{msam_forward.1} parent=5 // pred_region
      %s922 = ssub.s32 %s10, 2
      // Predicated region
      $region41: #{msam_forward.1} parent=39 // pred_check
        %p923 = pneg %p107
      $region42: #{msam_forward.1} parent=39 // pred_check_branch
        %925 = sbr.rel (%p923) target = $region44
      $region43: #{msam_forward.1} parent=39 // pred_region
        %p926 = scmp.lt.s32.totalorder %s16, 1
        %s927 = scalar_select %p926, %s16, 1
        %s928 = smul.addr %s927, 3
        %s929 = scalar_lea.vmem %s3, %s928
      $region44: #{msam_forward.1} parent=39 // pred_fallthru
        _
    $region40: #{msam_forward.1} parent=5 // pred_fallthru
      _
  $region6: #{msam_forward.1} parent=0 // loop_footer
    %s14 = sadd.s32 1, %s10
  $region7: #{msam_forward.1} parent=0 // loop_footer_branch
    %9 = sbr.rel target = $region3
  $region8: #{msam_forward.1} parent=0 // loop_exit
    _

</llo_original>
